<compile_context>
chip_gen: v5e
topology: v5e:2x2
jax: 0.10.0
libtpu: 0.0.40
codegen_flags: <defaults>
</compile_context>

<pallas_src>
import jax
import jax.numpy as jnp
from jax.experimental import pallas as pl
from jax.experimental.pallas import tpu as pltpu

NUM_BLOCKS = 3        # number of reversible blocks in the RevSequential container
MXU_MIN_CHANNELS = 8  # MXU handles >=8 contraction rows fine (mem-bound kernel); below -> VPU FMAs


# ---------------------------------------------------------------------------
# Kernel
# ---------------------------------------------------------------------------
def rev_seq_fused_kernel(x_ref, mt_ref, c_ref, y_ref):
    """One fused affine map per (C, tile_hw) channels-first tile: y = M^T @ x + c.

    x_ref, y_ref : (C, T)   channels on sublanes, H*W spatial on lanes
    mt_ref       : (C, C)   transposed composed weight M^T (bf16 iff activations bf16)
    c_ref        : (C, 1)   composed bias column, f32
    """
    C = x_ref.shape[0]
    if C >= MXU_MIN_CHANNELS:
        # MXU path: operands are already in their storage dtype (bf16 weights were
        # pre-cast in the wrapper), f32 accumulate.  No in-kernel input casts.
        acc = jnp.dot(mt_ref[...], x_ref[...], preferred_element_type=jnp.float32)
    else:
        # Tiny channel count (demo C=4): a matmul would use <1% of the MXU and pay
        # full push/drain latency; do C broadcast multiply-adds on the VPU instead.
        x = x_ref[...].astype(jnp.float32)
        mt = mt_ref[...].astype(jnp.float32)
        acc = jnp.zeros(x.shape, jnp.float32)
        for ci in range(C):
            acc = acc + mt[:, ci:ci + 1] * x[ci:ci + 1, :]
    # Single bias add + single output cast; stores are lane-dense (tile is a multiple
    # of 128 lanes or the full H*W extent).
    y_ref[...] = (acc + c_ref[...]).astype(y_ref.dtype)


# ---------------------------------------------------------------------------
# Wrapper helpers
# ---------------------------------------------------------------------------
def _vmem_capacity_bytes():
    """Physical VMEM of the current chip; conservative (v7x 64 MiB) fallback."""
    try:
        cap = int(pltpu.get_tpu_info().vmem_capacity_bytes)
        if cap > 0:
            return cap
    except Exception:
        pass
    return 64 * 1024 * 1024


def _max_tile_lanes(C, act_itemsize, vmem_cap):
    """Largest spatial tile (lanes) we allow, derived from VMEM capacity.

    Per-lane footprint ~= double-buffered in/out activation blocks (4 * itemsize)
    plus the f32 working set of the kernel body (~12 B).  Cap at 2048 lanes on
    64 MiB chips (v7x), 4096 on 128 MiB chips (v5e/v6e); never below 512 so DMA
    rows stay long and per-grid-step overhead is amortized.
    """
    per_lane = C * (4 * act_itemsize + 12)
    budget = int(0.30 * vmem_cap)
    hard_cap = 4096 if vmem_cap > (96 << 20) else 2048
    t = min(budget // max(per_lane, 1), hard_cap)
    return max(512, (t // 128) * 128)


def _choose_tile(HW, B, max_tile):
    """Pick the spatial tile: full extent when it fits (no masked tail), otherwise a
    multiple of 128 lanes >= 512, preferring zero waste and an even grid-step count
    (keeps both v7x TensorCores busy)."""
    if HW <= max_tile:
        return HW
    base = max(512, (max_tile // 128) * 128)
    best_t, best_key = base, None
    for t in range(base, 511, -128):
        n_sp = pl.cdiv(HW, t)
        waste = n_sp * t - HW
        even = 0 if (B * n_sp) % 2 == 0 else 1
        key = (waste, even, -t)
        if best_key is None or key < best_key:
            best_key, best_t = key, t
    return best_t


def _compiler_params(C, tile, act_itemsize, w_itemsize, vmem_cap):
    """dimension_semantics + (only if needed) an explicit VMEM budget with >=25% headroom."""
    io_bytes = 2 * 2 * C * tile * act_itemsize          # (in + out) x double buffer
    wt_bytes = 2 * (C * C * w_itemsize + C * 4)         # (M^T + c) x double buffer
    work_bytes = 3 * C * tile * 4                       # f32 accumulator + cast slack
    est = io_bytes + wt_bytes + work_bytes
    kwargs = dict(dimension_semantics=("parallel", "parallel"))
    if est > 12 * 1024 * 1024:                          # above the smallest scoped default
        limit = min(max(int(1.5 * est), 32 << 20), int(0.75 * vmem_cap))
        kwargs["vmem_limit_bytes"] = max(limit, est + (2 << 20))
    return pltpu.CompilerParams(**kwargs)


def _compose_affine(wf, bf, wg, bg):
    """Compose the NUM_BLOCKS additive couplings into one affine map (row form).

    Per block (row vectors):  y1 = x1 + x2 @ Wf + bf ;  y2 = x2 + y1 @ Wg + bg
      =>  z_out = z @ A + d,   A = [[I, Wg], [Wf, Wf@Wg + I]],  d = [bf, bf@Wg + bg]
    Composed in f32 on the host (tiny vs. activation traffic).
    Returns M^T (C, C) and c as a (C, 1) column for the channels-first kernel.
    """
    nb, C1, _ = wf.shape
    C = 2 * C1
    eye1 = jnp.eye(C1, dtype=jnp.float32)
    M = jnp.eye(C, dtype=jnp.float32)
    c = jnp.zeros((C,), jnp.float32)
    for blk in range(nb):
        Wf = wf[blk].astype(jnp.float32)
        Bf = bf[blk].astype(jnp.float32)
        Wg = wg[blk].astype(jnp.float32)
        Bg = bg[blk].astype(jnp.float32)
        A = jnp.concatenate(
            [jnp.concatenate([eye1, Wg], axis=1),
             jnp.concatenate([Wf, Wf @ Wg + eye1], axis=1)], axis=0)
        d = jnp.concatenate([Bf, Bf @ Wg + Bg], axis=0)
        M = M @ A
        c = c @ A + d
    return M.T, c[:, None]


# ---------------------------------------------------------------------------
# Public forward
# ---------------------------------------------------------------------------
def rev_sequential_forward(x_nchw, wf, bf, wg, bg, *, tile_hw=None):
    """Forward of RevSequential([AdditiveCoupling(F_i, G_i) for i in range(NUM_BLOCKS)]).

    x_nchw : (B, C, H, W)         activations (f32 or bf16)
    wf, wg : (NUM_BLOCKS, C1, C1) 1x1-conv weights (row-major: f = x2_rows @ wf[blk])
    bf, bg : (NUM_BLOCKS, C1)     biases
    tile_hw: optional cap on the spatial tile (lanes); default is auto (VMEM-derived).
    """
    B, C, H, W = x_nchw.shape
    assert C % 2 == 0, "channel dim must split into two streams"
    HW = H * W

    # NCHW is already channel-major: (B, C, H, W) -> (B, C, H*W) is a free reshape.
    x = x_nchw.reshape(B, C, HW)

    vmem_cap = _vmem_capacity_bytes()
    act_itemsize = x_nchw.dtype.itemsize
    max_tile = _max_tile_lanes(C, act_itemsize, vmem_cap)
    if tile_hw is not None:
        max_tile = min(max_tile, max(128, (int(tile_hw) // 128) * 128))
    tile = _choose_tile(HW, B, max_tile)
    n_sp = pl.cdiv(HW, tile)   # partial last block (if any) is masked by Pallas

    # Compose the whole reversible stack into one affine map; pre-cast the weight to
    # bf16 in the wrapper whenever activations are bf16 (bias stays f32).
    mt, c_col = _compose_affine(wf, bf, wg, bg)
    if x_nchw.dtype == jnp.bfloat16 and C >= MXU_MIN_CHANNELS:
        mt = mt.astype(jnp.bfloat16)

    x_spec = pl.BlockSpec((None, C, tile), lambda b, s: (b, 0, s))
    # Constant index_map -> fetched once, never re-DMA'd across the grid.
    m_spec = pl.BlockSpec((C, C), lambda b, s: (0, 0))
    c_spec = pl.BlockSpec((C, 1), lambda b, s: (0, 0))

    y = pl.pallas_call(
        rev_seq_fused_kernel,
        out_shape=jax.ShapeDtypeStruct((B, C, HW), x_nchw.dtype),
        grid_spec=pltpu.PrefetchScalarGridSpec(
            num_scalar_prefetch=0,
            grid=(B, n_sp),   # both axes parallel -> megacore-friendly on v7x
            in_specs=[x_spec, m_spec, c_spec],
            out_specs=x_spec,
        ),
        compiler_params=_compiler_params(C, tile, act_itemsize, mt.dtype.itemsize, vmem_cap),
    )(x, mt, c_col)

    return y.reshape(B, C, H, W)


# ---------------------------------------------------------------------------
# Pure-JAX block-by-block reference (module semantics), for correctness checks
# ---------------------------------------------------------------------------
def rev_sequential_reference(x_nchw, wf, bf, wg, bg):
    B, C, H, W = x_nchw.shape
    C1 = C // 2
    rows = jnp.transpose(x_nchw, (0, 2, 3, 1)).reshape(B * H * W, C)
    x1 = rows[:, :C1].astype(jnp.float32)
    x2 = rows[:, C1:].astype(jnp.float32)
    dot_dtype = (jnp.bfloat16
                 if (C1 >= 128 and x_nchw.dtype == jnp.bfloat16)
                 else jnp.float32)

    def couple(x, w, b):
        f = jnp.dot(x.astype(dot_dtype), w.astype(dot_dtype),
                    preferred_element_type=jnp.float32)
        return f + b[None, :].astype(jnp.float32)

    for blk in range(NUM_BLOCKS):
        y1 = x1 + couple(x2, wf[blk], bf[blk])
        y2 = x2 + couple(y1, wg[blk], bg[blk])
        x1, x2 = y1, y2
    y = jnp.concatenate([x1, x2], axis=-1).astype(x_nchw.dtype)
    return jnp.transpose(y.reshape(B, H, W, C), (0, 3, 1, 2))


if __name__ == "__main__":
    # ---- Config 1: module-sized demo (B=2, C=4, 16x16), f32, tiny-channel VPU path ----
    B, C, H, W = 2, 4, 16, 16
    C1 = C // 2
    k = jax.random.split(jax.random.PRNGKey(0), 5)
    x = jax.random.normal(k[0], (B, C, H, W), dtype=jnp.float32)
    wf = 0.1 * jax.random.normal(k[1], (NUM_BLOCKS, C1, C1), dtype=jnp.float32)
    bf = 0.1 * jax.random.normal(k[2], (NUM_BLOCKS, C1), dtype=jnp.float32)
    wg = 0.1 * jax.random.normal(k[3], (NUM_BLOCKS, C1, C1), dtype=jnp.float32)
    bg = 0.1 * jax.random.normal(k[4], (NUM_BLOCKS, C1), dtype=jnp.float32)

    out = jax.block_until_ready(rev_sequential_forward(x, wf, bf, wg, bg))
    ref = rev_sequential_reference(x, wf, bf, wg, bg)
    assert out.shape == (B, C, H, W)
    assert jnp.allclose(out, ref, atol=1e-5, rtol=1e-5), "config-1 mismatch vs reference"

    # ---- Config 2: wide channels -> bf16 MXU path, tiled spatial axis (no masked tail) ----
    B2, C2, H2, W2 = 2, 256, 32, 32            # H*W = 1024; tile_hw=512 -> 2 clean tiles
    C12 = C2 // 2
    k2 = jax.random.split(jax.random.PRNGKey(1), 5)
    x2 = jax.random.normal(k2[0], (B2, C2, H2, W2), dtype=jnp.float32).astype(jnp.bfloat16)
    wf2 = 0.05 * jax.random.normal(k2[1], (NUM_BLOCKS, C12, C12), dtype=jnp.float32)
    bf2 = 0.05 * jax.random.normal(k2[2], (NUM_BLOCKS, C12), dtype=jnp.float32)
    wg2 = 0.05 * jax.random.normal(k2[3], (NUM_BLOCKS, C12, C12), dtype=jnp.float32)
    bg2 = 0.05 * jax.random.normal(k2[4], (NUM_BLOCKS, C12), dtype=jnp.float32)

    out2 = jax.block_until_ready(
        rev_sequential_forward(x2, wf2, bf2, wg2, bg2, tile_hw=512))
    ref2 = rev_sequential_reference(x2, wf2, bf2, wg2, bg2)
    assert out2.shape == (B2, C2, H2, W2)
    assert out2.dtype == jnp.bfloat16
    # Fused-affine bf16 vs block-wise bf16 reference: small reassociation difference.
    assert jnp.allclose(out2.astype(jnp.float32), ref2.astype(jnp.float32),
                        atol=5e-2, rtol=5e-2), "config-2 mismatch vs reference"

    print("KERNEL_OK")
</pallas_src>

<mosaic_0001>
module attributes {stable_mosaic.version = 11 : i64} {
  func.func @rev_seq_fused_kernel(%arg0: i32, %arg1: i32, %arg2: memref<1x4x256xf32, #tpu.memory_space<vmem>>, %arg3: memref<4x4xf32, #tpu.memory_space<vmem>>, %arg4: memref<4x1xf32, #tpu.memory_space<vmem>>, %arg5: memref<1x4x256xf32, #tpu.memory_space<vmem>>) attributes {dimension_semantics = [#tpu.dimension_semantics<parallel>, #tpu.dimension_semantics<parallel>], iteration_bounds = array<i64: 2, 1>, scalar_prefetch = 0 : i64, scratch_operands = 0 : i64, tpu.core_type = #tpu.core_type<tc>, window_params = [{transform_indices = @transform_0, window_bounds = array<i64: 1, 4, 256>}, {pipeline_mode = #tpu.pipeline_mode<synchronous>, transform_indices = @transform_1, window_bounds = array<i64: 4, 4>}, {pipeline_mode = #tpu.pipeline_mode<synchronous>, transform_indices = @transform_2, window_bounds = array<i64: 4, 1>}, {transform_indices = @transform_3, window_bounds = array<i64: 1, 4, 256>}]} {
    %c0 = arith.constant 0 : index
    %c0_0 = arith.constant 0 : index
    %c0_1 = arith.constant 0 : index
    %0 = vector.load %arg2[%c0, %c0_0, %c0_1] : memref<1x4x256xf32, #tpu.memory_space<vmem>>, vector<1x4x256xf32>
    %1 = vector.shape_cast %0 : vector<1x4x256xf32> to vector<4x256xf32>
    %c0_2 = arith.constant 0 : index
    %c0_3 = arith.constant 0 : index
    %2 = vector.load %arg3[%c0_2, %c0_3] : memref<4x4xf32, #tpu.memory_space<vmem>>, vector<4x4xf32>
    %cst = arith.constant 0.000000e+00 : f32
    %3 = vector.broadcast %cst : f32 to vector<4x256xf32>
    %4 = vector.extract_strided_slice %2 {offsets = [0, 0], sizes = [4, 1], strides = [1, 1]} : vector<4x4xf32> to vector<4x1xf32>
    %5 = vector.extract_strided_slice %1 {offsets = [0, 0], sizes = [1, 256], strides = [1, 1]} : vector<4x256xf32> to vector<1x256xf32>
    %6 = vector.broadcast %4 : vector<4x1xf32> to vector<4x256xf32>
    %7 = vector.broadcast %5 : vector<1x256xf32> to vector<4x256xf32>
    %8 = arith.mulf %6, %7 : vector<4x256xf32>
    %9 = arith.addf %3, %8 : vector<4x256xf32>
    %10 = vector.extract_strided_slice %2 {offsets = [0, 1], sizes = [4, 1], strides = [1, 1]} : vector<4x4xf32> to vector<4x1xf32>
    %11 = vector.extract_strided_slice %1 {offsets = [1, 0], sizes = [1, 256], strides = [1, 1]} : vector<4x256xf32> to vector<1x256xf32>
    %12 = vector.broadcast %10 : vector<4x1xf32> to vector<4x256xf32>
    %13 = vector.broadcast %11 : vector<1x256xf32> to vector<4x256xf32>
    %14 = arith.mulf %12, %13 : vector<4x256xf32>
    %15 = arith.addf %9, %14 : vector<4x256xf32>
    %16 = vector.extract_strided_slice %2 {offsets = [0, 2], sizes = [4, 1], strides = [1, 1]} : vector<4x4xf32> to vector<4x1xf32>
    %17 = vector.extract_strided_slice %1 {offsets = [2, 0], sizes = [1, 256], strides = [1, 1]} : vector<4x256xf32> to vector<1x256xf32>
    %18 = vector.broadcast %16 : vector<4x1xf32> to vector<4x256xf32>
    %19 = vector.broadcast %17 : vector<1x256xf32> to vector<4x256xf32>
    %20 = arith.mulf %18, %19 : vector<4x256xf32>
    %21 = arith.addf %15, %20 : vector<4x256xf32>
    %22 = vector.extract_strided_slice %2 {offsets = [0, 3], sizes = [4, 1], strides = [1, 1]} : vector<4x4xf32> to vector<4x1xf32>
    %23 = vector.extract_strided_slice %1 {offsets = [3, 0], sizes = [1, 256], strides = [1, 1]} : vector<4x256xf32> to vector<1x256xf32>
    %24 = vector.broadcast %22 : vector<4x1xf32> to vector<4x256xf32>
    %25 = vector.broadcast %23 : vector<1x256xf32> to vector<4x256xf32>
    %26 = arith.mulf %24, %25 : vector<4x256xf32>
    %27 = arith.addf %21, %26 : vector<4x256xf32>
    %c0_4 = arith.constant 0 : index
    %c0_5 = arith.constant 0 : index
    %28 = vector.load %arg4[%c0_4, %c0_5] : memref<4x1xf32, #tpu.memory_space<vmem>>, vector<4x1xf32>
    %29 = vector.broadcast %28 : vector<4x1xf32> to vector<4x256xf32>
    %30 = arith.addf %27, %29 : vector<4x256xf32>
    %c0_6 = arith.constant 0 : index
    %c0_7 = arith.constant 0 : index
    %c0_8 = arith.constant 0 : index
    %31 = vector.load %arg5[%c0_6, %c0_7, %c0_8] : memref<1x4x256xf32, #tpu.memory_space<vmem>>, vector<1x4x256xf32>
    %32 = vector.shape_cast %31 : vector<1x4x256xf32> to vector<4x256xf32>
    %33 = vector.shape_cast %30 : vector<4x256xf32> to vector<1x4x256xf32>
    tpu.vector_store %arg5[%c0_6, %c0_7, %c0_8], %33 {strides = array<i32>} : memref<1x4x256xf32, #tpu.memory_space<vmem>>, vector<1x4x256xf32>,
    return
  }
  func.func @transform_0(%arg0: i32, %arg1: i32) -> (i32, i32, i32) {
    %c0_i32 = arith.constant 0 : i32
    %c0_i32_0 = arith.constant 0 : i32
    return %arg0, %c0_i32, %arg1 : i32, i32, i32
  }
  func.func @transform_1(%arg0: i32, %arg1: i32) -> (i32, i32) {
    %c0_i32 = arith.constant 0 : i32
    %c0_i32_0 = arith.constant 0 : i32
    %c0_i32_1 = arith.constant 0 : i32
    return %c0_i32, %c0_i32_0 : i32, i32
  }
  func.func @transform_2(%arg0: i32, %arg1: i32) -> (i32, i32) {
    %c0_i32 = arith.constant 0 : i32
    %c0_i32_0 = arith.constant 0 : i32
    %c0_i32_1 = arith.constant 0 : i32
    return %c0_i32, %c0_i32_0 : i32, i32
  }
  func.func @transform_3(%arg0: i32, %arg1: i32) -> (i32, i32, i32) {
    %c0_i32 = arith.constant 0 : i32
    %c0_i32_0 = arith.constant 0 : i32
    return %arg0, %c0_i32, %arg1 : i32, i32, i32
  }
}

</mosaic_0001>

<llo_original>
// kernel: tpu_custom_call.1
$region0: #{tpu_custom_call.1}
  #allocation0 [shape = 'u32[]', space=smem, size = 0x4, offset = 0x4, fixed_abs, tag = 'smem constant byte address 0x4 - core index']
  #allocation1 [shape = 'u32[72,128]{1,0:T(1,128)}', space=vmem, size = 0x9000, scoped, tag = 'internal scratch']
  %s0 = inlined_call_operand.hbm [shape: f32[2,4,256], index: 0, kind: input, shape index: {}]
  %s1 = inlined_call_operand.vmem [shape: f32[4,4], index: 1, kind: input, shape index: {}]
  %s2 = inlined_call_operand.vmem [shape: f32[4,1], index: 2, kind: input, shape index: {}]
  %s3 = inlined_call_operand.hbm [shape: f32[2,4,256], index: 3, kind: output, shape index: {}]
  %s4 = sld [smem:[#allocation0]]
  $region49: #{tpu_custom_call.1} parent=0
    _
  %s6 = ssub.s32 1, %s4
  %s7 = scalar_select 0, %s6, %s4
  $region1: #{tpu_custom_call.1} parent=0
    #allocation2 [shape = 'u8[8192]{0}', space=vmem, size = 0x2000, scoped, tag = 'input window, operand 0']
    #allocation3 [shape = 's32[2]{0}', space=sflag, size = 0x8, scoped, tag = 'scoped memory for tpu_custom_call.1']
    #allocation4 [shape = 's32[2]{0}', space=sflag, size = 0x8, scoped, tag = 'scoped memory for tpu_custom_call.1']
    #allocation5 [shape = 'u8[8192]{0}', space=vmem, size = 0x2000, scoped, tag = 'output window, operand 0']
    %8 = vsyncpa [#allocation3], 0
    %s9 = scalar_lea.sflag [#allocation3], 1
    %10 = vsyncpa %s9, 0
    %11 = vsyncpa [#allocation4], 0
    %s12 = scalar_lea.sflag [#allocation4], 1
    %13 = vsyncpa %s12, 0
    loop: start=0, step=1, limit=4
    $region2: #{tpu_custom_call.1} parent=1 // loop_pre_header
      _
    $region3: #{tpu_custom_call.1} parent=1 // loop_header
      %s15 = sphi 0, %s19
      %p16 = scmp.ge.s32.totalorder %s15, 4
      %s22 = sphi 0, %s34
      %s23 = sphi 0, %s30
      %s24 = sphi 0, %s22
      %s25 = sphi 0, %s23
      %s26 = sphi 0, %s24
      %s27 = sphi 0, %s25
      %s39 = sphi 0, %s41
      %s42 = sphi 0, %s39
      %s43 = sphi 0, %s42
      %s59 = sphi 0, %s43
      %s63 = sphi 0, %s63
      %s65 = sphi 0, %s63
      %s66 = sphi 0, %s65
      %s80 = sphi 0, %s66
      %s84 = sphi 0, %s84
      %s86 = sphi 0, %s84
      %s87 = sphi 0, %s86
      %s101 = sphi 0, %s87
      %s109 = sphi 0, %s111
      %s112 = sphi 0, %s109
      %s113 = sphi 0, %s112
      %s129 = sphi 0, %s113
    $region4: #{tpu_custom_call.1} parent=1 // loop_header_branch
      %18 = sbr.rel (%p16) target = $region8
    $region5: #{tpu_custom_call.1} parent=1 // loop_body
      %s20 = ssub.s32 %s15, 1
      %s21 = ssub.s32 %s15, 2
      %s28 = sadd.s32 1, %s23
      %p29 = scmp.ge.s32.totalorder %s28, 1
      %s30 = scalar_select %p29, 0, %s28
      %s31 = sadd.s32 1, %s22
      %s32 = scalar_select %p29, %s31, %s22
      %p33 = scmp.ge.s32.totalorder %s32, 2
      %s34 = scalar_select %p33, 0, %s32
      %s35 = ssub.s32 %s22, %s34
      %s36 = ssub.s32 %s23, %s30
      %s37 = sor.u32 %s35, %s36
      %p38 = scmp.eq.s32.totalorder %s37, 0
      %s40 = sadd.s32 %s39, 1
      %s41 = scalar_select %p38, %s39, %s40
      %p44 = pneg %p38
      %p45 = scmp.eq.s32.totalorder %s15, 1
      %p46 = por %p44, %p45
      %p47 = scmp.ne.s32.totalorder %s39, %s42
      %p48 = scmp.eq.s32.totalorder %s15, 0
      %p49 = por %p47, %p48
      %p50 = scmp.ne.s32.totalorder %s39, %s42
      %p51 = scmp.eq.s32.totalorder %s20, 1
      %p52 = por %p50, %p51
      %p53 = scmp.ne.s32.totalorder %s42, %s43
      %p54 = scmp.eq.s32.totalorder %s20, 0
      %p55 = por %p53, %p54
      %p56 = scmp.ne.s32.totalorder %s42, %s43
      %p57 = scmp.eq.s32.totalorder %s21, 1
      %p58 = por %p56, %p57
      %p60 = scmp.ne.s32.totalorder %s43, %s59
      %p61 = scmp.eq.s32.totalorder %s21, 0
      %p62 = por %p60, %p61
      %s64 = sadd.s32 %s63, 1
      %p67 = scmp.eq.s32.totalorder %s15, 1
      %p68 = scmp.ne.s32.totalorder %s63, %s65
      %p69 = scmp.eq.s32.totalorder %s15, 0
      %p70 = por %p68, %p69
      %p71 = scmp.ne.s32.totalorder %s63, %s65
      %p72 = scmp.eq.s32.totalorder %s20, 1
      %p73 = por %p71, %p72
      %p74 = scmp.ne.s32.totalorder %s65, %s66
      %p75 = scmp.eq.s32.totalorder %s20, 0
      %p76 = por %p74, %p75
      %p77 = scmp.ne.s32.totalorder %s65, %s66
      %p78 = scmp.eq.s32.totalorder %s21, 1
      %p79 = por %p77, %p78
      %p81 = scmp.ne.s32.totalorder %s66, %s80
      %p82 = scmp.eq.s32.totalorder %s21, 0
      %p83 = por %p81, %p82
      %s85 = sadd.s32 %s84, 1
      %p88 = scmp.eq.s32.totalorder %s15, 1
      %p89 = scmp.ne.s32.totalorder %s84, %s86
      %p90 = scmp.eq.s32.totalorder %s15, 0
      %p91 = por %p89, %p90
      %p92 = scmp.ne.s32.totalorder %s84, %s86
      %p93 = scmp.eq.s32.totalorder %s20, 1
      %p94 = por %p92, %p93
      %p95 = scmp.ne.s32.totalorder %s86, %s87
      %p96 = scmp.eq.s32.totalorder %s20, 0
      %p97 = por %p95, %p96
      %p98 = scmp.ne.s32.totalorder %s86, %s87
      %p99 = scmp.eq.s32.totalorder %s21, 1
      %p100 = por %p98, %p99
      %p102 = scmp.ne.s32.totalorder %s87, %s101
      %p103 = scmp.eq.s32.totalorder %s21, 0
      %p104 = por %p102, %p103
      %s105 = ssub.s32 %s22, %s34
      %s106 = ssub.s32 %s23, %s30
      %s107 = sor.u32 %s105, %s106
      %p108 = scmp.eq.s32.totalorder %s107, 0
      %s110 = sadd.s32 %s109, 1
      %s111 = scalar_select %p108, %s109, %s110
      %p114 = pneg %p108
      %p115 = scmp.eq.s32.totalorder %s15, 1
      %p116 = por %p114, %p115
      %p117 = scmp.ne.s32.totalorder %s109, %s112
      %p118 = scmp.eq.s32.totalorder %s15, 0
      %p119 = por %p117, %p118
      %p120 = scmp.ne.s32.totalorder %s109, %s112
      %p121 = scmp.eq.s32.totalorder %s20, 1
      %p122 = por %p120, %p121
      %p123 = scmp.ne.s32.totalorder %s112, %s113
      %p124 = scmp.eq.s32.totalorder %s20, 0
      %p125 = por %p123, %p124
      %p126 = scmp.ne.s32.totalorder %s112, %s113
      %p127 = scmp.eq.s32.totalorder %s21, 1
      %p128 = por %p126, %p127
      %p130 = scmp.ne.s32.totalorder %s113, %s129
      %p131 = scmp.eq.s32.totalorder %s21, 0
      %p132 = por %p130, %p131
      %p133 = scmp.le.s32.totalorder 1, %s15
      %p134 = scmp.lt.s32.totalorder %s15, 3
      %p135 = pnand %p133, %p134
      %p136 = pneg %p135
      // Predicated region
      $region9: #{tpu_custom_call.1} parent=5 // pred_check
        _
      $region10: #{tpu_custom_call.1} parent=5 // pred_check_branch
        %138 = sbr.rel (%p135) target = $region12
      $region11: #{tpu_custom_call.1} parent=5 // pred_region
        %s139 = ssub.s32 %s15, 1
        // Predicated region
        $region13: #{tpu_custom_call.1} parent=11 // pred_check
          %p140 = pneg %p76
        $region14: #{tpu_custom_call.1} parent=11 // pred_check_branch
          %142 = sbr.rel (%p140) target = $region16
        $region15: #{tpu_custom_call.1} parent=11 // pred_region
          _
        $region16: #{tpu_custom_call.1} parent=11 // pred_fallthru
          _
        // Predicated region
        $region17: #{tpu_custom_call.1} parent=11 // pred_check
          %p143 = pneg %p97
        $region18: #{tpu_custom_call.1} parent=11 // pred_check_branch
          %145 = sbr.rel (%p143) target = $region20
        $region19: #{tpu_custom_call.1} parent=11 // pred_region
          _
        $region20: #{tpu_custom_call.1} parent=11 // pred_fallthru
          _
      $region12: #{tpu_custom_call.1} parent=5 // pred_fallthru
        _
      %p146 = scmp.lt.s32.totalorder %s15, 2
      // Predicated region
      $region21: #{tpu_custom_call.1} parent=5 // pred_check
        %p147 = pneg %p146
      $region22: #{tpu_custom_call.1} parent=5 // pred_check_branch
        %149 = sbr.rel (%p147) target = $region24
      $region23: #{tpu_custom_call.1} parent=5 // pred_region
        // Predicated region
        $region25: #{tpu_custom_call.1} parent=23 // pred_check
          %p150 = pneg %p49
        $region26: #{tpu_custom_call.1} parent=23 // pred_check_branch
          %152 = sbr.rel (%p150) target = $region28
        $region27: #{tpu_custom_call.1} parent=23 // pred_region
          %s153 = sand.u32 %s39, 1
          %s154 = scalar_lea.sflag [#allocation3], %s153
          %s155 = sand.u32 %s39, 1
          %s156 = smul.addr %s155, 8
          %s157 = scalar_lea.vmem [#allocation2], %s156
          %s158 = smul.u32 2, %s23
          %160 = vsyncadd %s154, 0
          %s161 = smul.addr %s22, 2
          %s162 = sadd.s32 %s158, %s161
          %s163 = smul.addr %s162, 4
          %s164 = scalar_lea.hbm %s0, %s163
          %s166 = sshll.u32 %s164, 4
          %s167 = int_to_ptr.hbm [resolvable:$true] %s166
          %s168 = sshll.u32 %s157, 4
          %s169 = int_to_ptr.vmem [resolvable:$true] %s168
          %171 = dma.hbm_to_vmem [thread:$0]  %s167, 128, %s169, %s154
        $region28: #{tpu_custom_call.1} parent=23 // pred_fallthru
          _
      $region24: #{tpu_custom_call.1} parent=5 // pred_fallthru
        _
      %p172 = scmp.le.s32.totalorder 1, %s15
      %p173 = scmp.lt.s32.totalorder %s15, 3
      %p174 = pnand %p172, %p173
      %p175 = pneg %p174
      // Predicated region
      $region29: #{tpu_custom_call.1} parent=5 // pred_check
        _
      $region30: #{tpu_custom_call.1} parent=5 // pred_check_branch
        %177 = sbr.rel (%p174) target = $region32
      $region31: #{tpu_custom_call.1} parent=5 // pred_region
        %s178 = ssub.s32 %s15, 1
        %s179 = sand.u32 %s42, 1
        %s180 = scalar_lea.sflag [#allocation3], %s179
        %s181 = sand.u32 %s42, 1
        %s182 = smul.addr %s181, 8
        %s183 = scalar_lea.vmem [#allocation2], %s182
        // Predicated region
        $region33: #{tpu_custom_call.1} parent=31 // pred_check
          %p184 = pneg %p55
        $region34: #{tpu_custom_call.1} parent=31 // pred_check_branch
          %186 = sbr.rel (%p184) target = $region36
        $region35: #{tpu_custom_call.1} parent=31 // pred_region
          %188 = dma.done %s180, 128
        $region36: #{tpu_custom_call.1} parent=31 // pred_fallthru
          _
        %s189 = sand.u32 %s42, 1
        %s190 = scalar_lea.sflag [#allocation3], %s189
        %s191 = sand.u32 %s42, 1
        %s192 = smul.addr %s191, 8
        %s193 = scalar_lea.vmem [#allocation2], %s192
        %p194 = pneg %p55
        %p195 = pneg %p52
        %p196 = pneg %p76
        %p197 = pneg %p73
        %p198 = pneg %p97
        %p199 = pneg %p94
        %p200 = pneg %p125
        %p201 = pneg %p122
        %s202 = sand.u32 %s112, 1
        %s203 = scalar_lea.sflag [#allocation4], %s202
        %s204 = sand.u32 %s112, 1
        %s205 = smul.addr %s204, 8
        %s206 = scalar_lea.vmem [#allocation5], %s205
        %s207 = smul.u32 2, %s25
        %s208 = smul.u32 2, %s25
        %v209 = vld [vmem:[%s183] sm:$0xff]
        %v210 = vld [vmem:[%s1] sm:$0xf]
        %212 = vset.pattern.permute.xlu0 0
        %213 = vperm.xlu0 %212, %v210
        %v214 = vpop.permute.xlu0 %213
        %v217 = vperm.slane %v209, 0
        %v218 = vperm.slane %v209, 4
        %v221 = vperm.slane %v217, 0
        %v222 = vperm.slane %v218, 0
        %v223 = vmul.f32 %v214, %v221
        %v224 = vmul.f32 %v214, %v222
        %v225 = vadd.f32 %v223, 0.0
        %v226 = vadd.f32 %v224, 0.0
        %227 = vset.pattern.permute.xlu0 1
        %228 = vperm.xlu0 %227, %v210
        %v229 = vpop.permute.xlu0 %228
        %v231 = vperm.slane %v209, 1
        %v232 = vperm.slane %v209, 5
        %v235 = vperm.slane %v231, 1
        %v236 = vperm.slane %v232, 1
        %v237 = vmul.f32 %v229, %v235
        %v238 = vmul.f32 %v229, %v236
        %v239 = vadd.f32 %v225, %v237
        %v240 = vadd.f32 %v226, %v238
        %241 = vset.pattern.permute.xlu0 2
        %242 = vperm.xlu0 %241, %v210
        %v243 = vpop.permute.xlu0 %242
        %v245 = vperm.slane %v209, 2
        %v246 = vperm.slane %v209, 6
        %v249 = vperm.slane %v245, 2
        %v250 = vperm.slane %v246, 2
        %v251 = vmul.f32 %v243, %v249
        %v252 = vmul.f32 %v243, %v250
        %v253 = vadd.f32 %v239, %v251
        %v254 = vadd.f32 %v240, %v252
        %255 = vset.pattern.permute.xlu0 3
        %256 = vperm.xlu0 %255, %v210
        %v257 = vpop.permute.xlu0 %256
        %v259 = vperm.slane %v209, 3
        %v260 = vperm.slane %v209, 7
        %v263 = vperm.slane %v259, 3
        %v264 = vperm.slane %v260, 3
        %v265 = vmul.f32 %v257, %v263
        %v266 = vmul.f32 %v257, %v264
        %v267 = vadd.f32 %v253, %v265
        %v268 = vadd.f32 %v254, %v266
        %v269 = vld [vmem:[%s2] sm:$0xf]
        %271 = vset.pattern.permute.xlu0 0
        %272 = vperm.xlu0 %271, %v269
        %v273 = vpop.permute.xlu0 %272
        %v275 = vadd.f32 %v267, %v273
        %v276 = vadd.f32 %v268, %v273
        %v279 = vrot.slane %v276, 4
        %vm280 = vcmask 1043456
        %v281 = vsel %vm280, %v275, %v279
        %283 = vst [vmem:[%s206] sm:$0xff] %v281
        %s284 = sand.u32 %s112, 1
        %s285 = scalar_lea.sflag [#allocation4], %s284
        %s286 = sand.u32 %s112, 1
        %s287 = smul.addr %s286, 8
        %s288 = scalar_lea.vmem [#allocation5], %s287
        // Predicated region
        $region37: #{tpu_custom_call.1} parent=31 // pred_check
          %p289 = pneg %p122
        $region38: #{tpu_custom_call.1} parent=31 // pred_check_branch
          %291 = sbr.rel (%p289) target = $region40
        $region39: #{tpu_custom_call.1} parent=31 // pred_region
          %s292 = smul.u32 2, %s25
          %294 = vsyncadd %s285, 0
          %s295 = smul.addr %s24, 2
          %s296 = sadd.s32 %s292, %s295
          %s297 = smul.addr %s296, 4
          %s298 = scalar_lea.hbm %s3, %s297
          %s300 = sshll.u32 %s288, 4
          %s301 = int_to_ptr.vmem [resolvable:$true] %s300
          %s302 = sshll.u32 %s298, 4
          %s303 = int_to_ptr.hbm [resolvable:$true] %s302
          %305 = dma.vmem_to_hbm [thread:$0]  %s301, 128, %s303, %s285
        $region40: #{tpu_custom_call.1} parent=31 // pred_fallthru
          _
      $region32: #{tpu_custom_call.1} parent=5 // pred_fallthru
        _
      %p306 = scmp.le.s32.totalorder 2, %s15
      // Predicated region
      $region41: #{tpu_custom_call.1} parent=5 // pred_check
        %p307 = pneg %p306
      $region42: #{tpu_custom_call.1} parent=5 // pred_check_branch
        %309 = sbr.rel (%p307) target = $region44
      $region43: #{tpu_custom_call.1} parent=5 // pred_region
        %s310 = ssub.s32 %s15, 2
        // Predicated region
        $region45: #{tpu_custom_call.1} parent=43 // pred_check
          %p311 = pneg %p128
        $region46: #{tpu_custom_call.1} parent=43 // pred_check_branch
          %313 = sbr.rel (%p311) target = $region48
        $region47: #{tpu_custom_call.1} parent=43 // pred_region
          %s314 = sand.u32 %s113, 1
          %s315 = scalar_lea.sflag [#allocation4], %s314
          %s316 = sand.u32 %s113, 1
          %s317 = smul.addr %s316, 8
          %s318 = scalar_lea.vmem [#allocation5], %s317
          %320 = dma.done %s315, 128
        $region48: #{tpu_custom_call.1} parent=43 // pred_fallthru
          _
      $region44: #{tpu_custom_call.1} parent=5 // pred_fallthru
        _
    $region6: #{tpu_custom_call.1} parent=1 // loop_footer
      %s19 = sadd.s32 1, %s15
    $region7: #{tpu_custom_call.1} parent=1 // loop_footer_branch
      %14 = sbr.rel target = $region3
    $region8: #{tpu_custom_call.1} parent=1 // loop_exit
      _
    %321 = vsyncpa [#allocation3], 1
    %s322 = scalar_lea.sflag [#allocation3], 1
    %323 = vsyncpa %s322, 1
    %324 = vsyncpa [#allocation4], 1
    %s325 = scalar_lea.sflag [#allocation4], 1
    %326 = vsyncpa %s325, 1

</llo_original>
